<compile_context>
chip_gen: v6e
topology: v6e:2x2x1
jax: 0.10.0
libtpu: 0.0.40
codegen_flags: <defaults>
</compile_context>

<pallas_src>
import functools

import jax
import jax.numpy as jnp
from jax.experimental import pallas as pl
from jax.experimental.pallas import tpu as pltpu

EMBEDDING_SIZE = 4
HIDDEN_SIZE = 4
INPUT_SIZE = 4     # vocab size
NUM_CLASSES = 4
NUM_LAYERS = 1

# Packed parameter slab layout, single (16, 16) f32 operand:
#   rows 0:4 , cols 0:16 -> table = emb @ w_ih.T + (b_ih + b_hh)   (V, 4H)
#   rows 4:8 , cols 0:16 -> w_hh.T                                 (H, 4H)
#   rows 8:12, cols 0:4  -> w_fc.T                                 (H, C)
#   row  12  , cols 0:4  -> b_fc                                   (1, C)
_SLAB_ROWS = 16
_SLAB_COLS = 16


def _emb_lstm_fc_kernel(x_ref, slab_ref, out_ref, *, T, B):
    """Fused Embedding -> LSTM -> Linear forward.

    x_ref:    (T*B, 1) int32 token ids, time-major (row = t*B + b)
    slab_ref: (16, 16) packed parameters (see layout above)
    out_ref:  (B*T, C) batch-major (row = b*T + t), matches x.view(-1, C)
    Gate order (PyTorch LSTM): [i, f, g, o].
    """
    V, H, C = INPUT_SIZE, HIDDEN_SIZE, NUM_CLASSES

    # Static slices of the single packed slab (free).
    table = slab_ref[0:V, :]                              # (V, 4H)
    whh = slab_ref[V:V + H, :]                            # (H, 4H)  = w_hh.T
    wfc = slab_ref[V + H:V + 2 * H, 0:C]                  # (H, C)   = w_fc.T
    bfc = slab_ref[V + 2 * H:V + 2 * H + 1, 0:C]          # (1, C)

    # --- Embedding + input projection in one shot: one-hot(idx) @ table ---
    idx = x_ref[...]                                      # (T*B, 1)
    iota_v = jax.lax.broadcasted_iota(jnp.int32, (T * B, V), 1)
    onehot = (idx == iota_v).astype(jnp.float32)          # (T*B, V)
    gates_x = jnp.dot(onehot, table,
                      preferred_element_type=jnp.float32)  # (T*B, 4H)

    # Column scale for the single-tanh trick: sigmoid(x) = 0.5*tanh(0.5x)+0.5.
    # i/f/o columns scaled by 0.5, g columns by 1.0 -> one tanh push per step.
    lane = jax.lax.broadcasted_iota(jnp.int32, (1, 4 * H), 1)
    is_g_col = (lane >= 2 * H) & (lane < 3 * H)
    col_scale = jnp.where(is_g_col, jnp.float32(1.0), jnp.float32(0.5))

    h = jnp.zeros((B, H), jnp.float32)
    c = jnp.zeros((B, H), jnp.float32)
    hs = []
    # Fully unrolled recurrence (T static). Recurrent projection rides the MXU.
    for t in range(T):
        g = gates_x[t * B:(t + 1) * B, :] + jnp.dot(
            h, whh, preferred_element_type=jnp.float32)   # (B, 4H)
        t_all = jnp.tanh(g * col_scale)                   # one EUP push, all gates
        sig = 0.5 * t_all + 0.5                           # sigmoid for i/f/o cols
        i_g = sig[:, 0:H]
        f_g = sig[:, H:2 * H]
        g_g = t_all[:, 2 * H:3 * H]
        o_g = sig[:, 3 * H:4 * H]
        c = f_g * c + i_g * g_g
        h = o_g * jnp.tanh(c)
        hs.append(h)

    # Sublane-major assembly: (B, T, H) -> (B*T, H); row b*T + t, batch-major.
    hs_bt = jnp.stack(hs, axis=1).reshape(B * T, H)
    out_ref[...] = jnp.dot(hs_bt, wfc,
                           preferred_element_type=jnp.float32) + bfc


def model_forward(x_idx, params):
    """x_idx: (B, T) int32 token ids -> (B*T, NUM_CLASSES) float32."""
    emb, w_ih, w_hh, b_ih, b_hh, w_fc, b_fc = params
    B, T = x_idx.shape
    V, H, C = INPUT_SIZE, HIDDEN_SIZE, NUM_CLASSES

    # Host/XLA-side (tiny, one-time) parameter prep: fuse emb + input proj and
    # pack everything into a single VMEM slab (one DMA instead of four).
    table = emb @ w_ih.T + (b_ih + b_hh)                  # (V, 4H)
    slab = jnp.zeros((_SLAB_ROWS, _SLAB_COLS), jnp.float32)
    slab = slab.at[0:V, :].set(table)
    slab = slab.at[V:V + H, :].set(w_hh.T)
    slab = slab.at[V + H:V + 2 * H, 0:C].set(w_fc.T)
    slab = slab.at[V + 2 * H, 0:C].set(b_fc)

    x_flat = x_idx.astype(jnp.int32).T.reshape(T * B, 1)  # time-major flattened

    kernel = functools.partial(_emb_lstm_fc_kernel, T=T, B=B)
    cost = pl.CostEstimate(
        flops=2 * (T * B * V * 4 * H + T * B * H * 4 * H + B * T * H * C),
        transcendentals=T * B * (4 * H + H),
        bytes_accessed=4 * (x_flat.size + slab.size + B * T * C),
    )
    out = pl.pallas_call(
        kernel,
        out_shape=jax.ShapeDtypeStruct((B * T, C), jnp.float32),
        in_specs=[pl.BlockSpec(memory_space=pltpu.MemorySpace.VMEM)] * 2,
        out_specs=pl.BlockSpec(memory_space=pltpu.MemorySpace.VMEM),
        cost_estimate=cost,
    )(x_flat, slab)
    # Already batch-major (B*T, C): matches PyTorch x.view(-1, num_classes).
    return out


def reference_forward(x_idx, params):
    """Pure-JAX reference mirroring the PyTorch forward."""
    emb, w_ih, w_hh, b_ih, b_hh, w_fc, b_fc = params
    B, T = x_idx.shape
    H = HIDDEN_SIZE
    x_e = emb[x_idx]                                      # (B, T, E)
    h = jnp.zeros((B, H), jnp.float32)
    c = jnp.zeros((B, H), jnp.float32)
    outs = []
    for t in range(T):
        g = x_e[:, t, :] @ w_ih.T + b_ih + h @ w_hh.T + b_hh
        i_g = jax.nn.sigmoid(g[:, 0:H])
        f_g = jax.nn.sigmoid(g[:, H:2 * H])
        g_g = jnp.tanh(g[:, 2 * H:3 * H])
        o_g = jax.nn.sigmoid(g[:, 3 * H:4 * H])
        c = f_g * c + i_g * g_g
        h = o_g * jnp.tanh(c)
        outs.append(h)
    hs = jnp.stack(outs, axis=1)                          # (B, T, H)
    y = hs @ w_fc.T + b_fc                                # (B, T, C)
    return y.reshape(B * T, NUM_CLASSES)


def init_params(key):
    H, E, V, C = HIDDEN_SIZE, EMBEDDING_SIZE, INPUT_SIZE, NUM_CLASSES
    ks = jax.random.split(key, 7)
    s = 1.0 / jnp.sqrt(jnp.float32(H))
    emb = jax.random.normal(ks[0], (V, E), jnp.float32)
    w_ih = jax.random.uniform(ks[1], (4 * H, E), jnp.float32, -s, s)
    w_hh = jax.random.uniform(ks[2], (4 * H, H), jnp.float32, -s, s)
    b_ih = jax.random.uniform(ks[3], (4 * H,), jnp.float32, -s, s)
    b_hh = jax.random.uniform(ks[4], (4 * H,), jnp.float32, -s, s)
    w_fc = jax.random.uniform(ks[5], (C, H), jnp.float32, -s, s)
    b_fc = jax.random.uniform(ks[6], (C,), jnp.float32, -s, s)
    return (emb, w_ih, w_hh, b_ih, b_hh, w_fc, b_fc)


if __name__ == "__main__":
    key = jax.random.PRNGKey(0)
    k_param, k_x = jax.random.split(key)
    params = init_params(k_param)

    B, T = 2, 8
    x_idx = jax.random.randint(k_x, (B, T), 0, INPUT_SIZE, dtype=jnp.int32)

    out = jax.block_until_ready(model_forward(x_idx, params))
    ref = jax.block_until_ready(reference_forward(x_idx, params))

    assert out.shape == (B * T, NUM_CLASSES), out.shape
    assert jnp.allclose(out, ref, atol=1e-5, rtol=1e-5), "mismatch vs JAX reference"
    print("KERNEL_OK")
</pallas_src>

<mosaic_0001>
module attributes {stable_mosaic.version = 11 : i64} {
  func.func @_emb_lstm_fc_kernel(%arg0: memref<16x1xi32, #tpu.memory_space<vmem>>, %arg1: memref<16x16xf32, #tpu.memory_space<vmem>>, %arg2: memref<16x4xf32, #tpu.memory_space<vmem>>) attributes {dimension_semantics = [], scalar_prefetch = 0 : i64, scratch_operands = 0 : i64, tpu.core_type = #tpu.core_type<tc>} {
    %c0 = arith.constant 0 : index
    %c0_0 = arith.constant 0 : index
    %0 = vector.load %arg1[%c0, %c0_0] : memref<16x16xf32, #tpu.memory_space<vmem>>, vector<4x16xf32>
    %c4 = arith.constant 4 : index
    %c0_1 = arith.constant 0 : index
    %1 = vector.load %arg1[%c4, %c0_1] : memref<16x16xf32, #tpu.memory_space<vmem>>, vector<4x16xf32>
    %c8 = arith.constant 8 : index
    %c0_2 = arith.constant 0 : index
    %2 = vector.load %arg1[%c8, %c0_2] : memref<16x16xf32, #tpu.memory_space<vmem>>, vector<4x4xf32>
    %c12 = arith.constant 12 : index
    %c0_3 = arith.constant 0 : index
    %3 = vector.load %arg1[%c12, %c0_3] : memref<16x16xf32, #tpu.memory_space<vmem>>, vector<1x4xf32>
    %c0_4 = arith.constant 0 : index
    %c0_5 = arith.constant 0 : index
    %4 = vector.load %arg0[%c0_4, %c0_5] : memref<16x1xi32, #tpu.memory_space<vmem>>, vector<16x1xi32>
    %5 = tpu.iota {dimensions = array<i32: 1>} : vector<16x4xi32>
    %6 = vector.broadcast %4 : vector<16x1xi32> to vector<16x4xi32>
    %7 = arith.cmpi eq, %6, %5 : vector<16x4xi32>
    %8 = arith.extui %7 : vector<16x4xi1> to vector<16x4xi32>
    %9 = arith.sitofp %8 : vector<16x4xi32> to vector<16x4xf32>
    %cst = arith.constant dense<0.000000e+00> : vector<16x16xf32>
    %10 = tpu.matmul %9, %0, %cst {dimension_numbers = #tpu.dot_dimension_numbers<[1], [0], [0], [1], [0, 0, 1, 1], [], []>} : vector<16x4xf32>, vector<4x16xf32>, vector<16x16xf32> -> vector<16x16xf32>
    %11 = tpu.iota {dimensions = array<i32: 1>} : vector<1x16xi32>
    %c8_i32 = arith.constant 8 : i32
    %12 = vector.broadcast %c8_i32 : i32 to vector<1x16xi32>
    %13 = arith.cmpi sge, %11, %12 : vector<1x16xi32>
    %c12_i32 = arith.constant 12 : i32
    %14 = vector.broadcast %c12_i32 : i32 to vector<1x16xi32>
    %15 = arith.cmpi slt, %11, %14 : vector<1x16xi32>
    %16 = arith.andi %13, %15 : vector<1x16xi1>
    %cst_6 = arith.constant 1.000000e+00 : f32
    %cst_7 = arith.constant 5.000000e-01 : f32
    %17 = vector.broadcast %cst_6 : f32 to vector<1x16xf32>
    %18 = vector.broadcast %cst_7 : f32 to vector<1x16xf32>
    %19 = arith.select %16, %17, %18 : vector<1x16xi1>, vector<1x16xf32>
    %cst_8 = arith.constant 0.000000e+00 : f32
    %20 = vector.broadcast %cst_8 : f32 to vector<2x4xf32>
    %cst_9 = arith.constant 0.000000e+00 : f32
    %21 = vector.broadcast %cst_9 : f32 to vector<2x4xf32>
    %22 = vector.extract_strided_slice %10 {offsets = [0, 0], sizes = [2, 16], strides = [1, 1]} : vector<16x16xf32> to vector<2x16xf32>
    %cst_10 = arith.constant dense<0.000000e+00> : vector<2x16xf32>
    %23 = tpu.matmul %20, %1, %cst_10 {dimension_numbers = #tpu.dot_dimension_numbers<[1], [0], [0], [1], [0, 0, 1, 1], [], []>} : vector<2x4xf32>, vector<4x16xf32>, vector<2x16xf32> -> vector<2x16xf32>
    %24 = arith.addf %22, %23 : vector<2x16xf32>
    %25 = vector.broadcast %19 : vector<1x16xf32> to vector<2x16xf32>
    %26 = arith.mulf %24, %25 : vector<2x16xf32>
    %27 = math.tanh %26 : vector<2x16xf32>
    %cst_11 = arith.constant 5.000000e-01 : f32
    %28 = vector.broadcast %cst_11 : f32 to vector<2x16xf32>
    %29 = arith.mulf %28, %27 : vector<2x16xf32>
    %cst_12 = arith.constant 5.000000e-01 : f32
    %30 = vector.broadcast %cst_12 : f32 to vector<2x16xf32>
    %31 = arith.addf %29, %30 : vector<2x16xf32>
    %32 = vector.extract_strided_slice %31 {offsets = [0, 0], sizes = [2, 4], strides = [1, 1]} : vector<2x16xf32> to vector<2x4xf32>
    %33 = vector.extract_strided_slice %31 {offsets = [0, 4], sizes = [2, 4], strides = [1, 1]} : vector<2x16xf32> to vector<2x4xf32>
    %34 = vector.extract_strided_slice %27 {offsets = [0, 8], sizes = [2, 4], strides = [1, 1]} : vector<2x16xf32> to vector<2x4xf32>
    %35 = vector.extract_strided_slice %31 {offsets = [0, 12], sizes = [2, 4], strides = [1, 1]} : vector<2x16xf32> to vector<2x4xf32>
    %36 = arith.mulf %33, %21 : vector<2x4xf32>
    %37 = arith.mulf %32, %34 : vector<2x4xf32>
    %38 = arith.addf %36, %37 : vector<2x4xf32>
    %39 = math.tanh %38 : vector<2x4xf32>
    %40 = arith.mulf %35, %39 : vector<2x4xf32>
    %41 = vector.extract_strided_slice %10 {offsets = [2, 0], sizes = [2, 16], strides = [1, 1]} : vector<16x16xf32> to vector<2x16xf32>
    %cst_13 = arith.constant dense<0.000000e+00> : vector<2x16xf32>
    %42 = tpu.matmul %40, %1, %cst_13 {dimension_numbers = #tpu.dot_dimension_numbers<[1], [0], [0], [1], [0, 0, 1, 1], [], []>} : vector<2x4xf32>, vector<4x16xf32>, vector<2x16xf32> -> vector<2x16xf32>
    %43 = arith.addf %41, %42 : vector<2x16xf32>
    %44 = vector.broadcast %19 : vector<1x16xf32> to vector<2x16xf32>
    %45 = arith.mulf %43, %44 : vector<2x16xf32>
    %46 = math.tanh %45 : vector<2x16xf32>
    %cst_14 = arith.constant 5.000000e-01 : f32
    %47 = vector.broadcast %cst_14 : f32 to vector<2x16xf32>
    %48 = arith.mulf %47, %46 : vector<2x16xf32>
    %cst_15 = arith.constant 5.000000e-01 : f32
    %49 = vector.broadcast %cst_15 : f32 to vector<2x16xf32>
    %50 = arith.addf %48, %49 : vector<2x16xf32>
    %51 = vector.extract_strided_slice %50 {offsets = [0, 0], sizes = [2, 4], strides = [1, 1]} : vector<2x16xf32> to vector<2x4xf32>
    %52 = vector.extract_strided_slice %50 {offsets = [0, 4], sizes = [2, 4], strides = [1, 1]} : vector<2x16xf32> to vector<2x4xf32>
    %53 = vector.extract_strided_slice %46 {offsets = [0, 8], sizes = [2, 4], strides = [1, 1]} : vector<2x16xf32> to vector<2x4xf32>
    %54 = vector.extract_strided_slice %50 {offsets = [0, 12], sizes = [2, 4], strides = [1, 1]} : vector<2x16xf32> to vector<2x4xf32>
    %55 = arith.mulf %52, %38 : vector<2x4xf32>
    %56 = arith.mulf %51, %53 : vector<2x4xf32>
    %57 = arith.addf %55, %56 : vector<2x4xf32>
    %58 = math.tanh %57 : vector<2x4xf32>
    %59 = arith.mulf %54, %58 : vector<2x4xf32>
    %60 = vector.extract_strided_slice %10 {offsets = [4, 0], sizes = [2, 16], strides = [1, 1]} : vector<16x16xf32> to vector<2x16xf32>
    %cst_16 = arith.constant dense<0.000000e+00> : vector<2x16xf32>
    %61 = tpu.matmul %59, %1, %cst_16 {dimension_numbers = #tpu.dot_dimension_numbers<[1], [0], [0], [1], [0, 0, 1, 1], [], []>} : vector<2x4xf32>, vector<4x16xf32>, vector<2x16xf32> -> vector<2x16xf32>
    %62 = arith.addf %60, %61 : vector<2x16xf32>
    %63 = vector.broadcast %19 : vector<1x16xf32> to vector<2x16xf32>
    %64 = arith.mulf %62, %63 : vector<2x16xf32>
    %65 = math.tanh %64 : vector<2x16xf32>
    %cst_17 = arith.constant 5.000000e-01 : f32
    %66 = vector.broadcast %cst_17 : f32 to vector<2x16xf32>
    %67 = arith.mulf %66, %65 : vector<2x16xf32>
    %cst_18 = arith.constant 5.000000e-01 : f32
    %68 = vector.broadcast %cst_18 : f32 to vector<2x16xf32>
    %69 = arith.addf %67, %68 : vector<2x16xf32>
    %70 = vector.extract_strided_slice %69 {offsets = [0, 0], sizes = [2, 4], strides = [1, 1]} : vector<2x16xf32> to vector<2x4xf32>
    %71 = vector.extract_strided_slice %69 {offsets = [0, 4], sizes = [2, 4], strides = [1, 1]} : vector<2x16xf32> to vector<2x4xf32>
    %72 = vector.extract_strided_slice %65 {offsets = [0, 8], sizes = [2, 4], strides = [1, 1]} : vector<2x16xf32> to vector<2x4xf32>
    %73 = vector.extract_strided_slice %69 {offsets = [0, 12], sizes = [2, 4], strides = [1, 1]} : vector<2x16xf32> to vector<2x4xf32>
    %74 = arith.mulf %71, %57 : vector<2x4xf32>
    %75 = arith.mulf %70, %72 : vector<2x4xf32>
    %76 = arith.addf %74, %75 : vector<2x4xf32>
    %77 = math.tanh %76 : vector<2x4xf32>
    %78 = arith.mulf %73, %77 : vector<2x4xf32>
    %79 = vector.extract_strided_slice %10 {offsets = [6, 0], sizes = [2, 16], strides = [1, 1]} : vector<16x16xf32> to vector<2x16xf32>
    %cst_19 = arith.constant dense<0.000000e+00> : vector<2x16xf32>
    %80 = tpu.matmul %78, %1, %cst_19 {dimension_numbers = #tpu.dot_dimension_numbers<[1], [0], [0], [1], [0, 0, 1, 1], [], []>} : vector<2x4xf32>, vector<4x16xf32>, vector<2x16xf32> -> vector<2x16xf32>
    %81 = arith.addf %79, %80 : vector<2x16xf32>
    %82 = vector.broadcast %19 : vector<1x16xf32> to vector<2x16xf32>
    %83 = arith.mulf %81, %82 : vector<2x16xf32>
    %84 = math.tanh %83 : vector<2x16xf32>
    %cst_20 = arith.constant 5.000000e-01 : f32
    %85 = vector.broadcast %cst_20 : f32 to vector<2x16xf32>
    %86 = arith.mulf %85, %84 : vector<2x16xf32>
    %cst_21 = arith.constant 5.000000e-01 : f32
    %87 = vector.broadcast %cst_21 : f32 to vector<2x16xf32>
    %88 = arith.addf %86, %87 : vector<2x16xf32>
    %89 = vector.extract_strided_slice %88 {offsets = [0, 0], sizes = [2, 4], strides = [1, 1]} : vector<2x16xf32> to vector<2x4xf32>
    %90 = vector.extract_strided_slice %88 {offsets = [0, 4], sizes = [2, 4], strides = [1, 1]} : vector<2x16xf32> to vector<2x4xf32>
    %91 = vector.extract_strided_slice %84 {offsets = [0, 8], sizes = [2, 4], strides = [1, 1]} : vector<2x16xf32> to vector<2x4xf32>
    %92 = vector.extract_strided_slice %88 {offsets = [0, 12], sizes = [2, 4], strides = [1, 1]} : vector<2x16xf32> to vector<2x4xf32>
    %93 = arith.mulf %90, %76 : vector<2x4xf32>
    %94 = arith.mulf %89, %91 : vector<2x4xf32>
    %95 = arith.addf %93, %94 : vector<2x4xf32>
    %96 = math.tanh %95 : vector<2x4xf32>
    %97 = arith.mulf %92, %96 : vector<2x4xf32>
    %98 = vector.extract_strided_slice %10 {offsets = [8, 0], sizes = [2, 16], strides = [1, 1]} : vector<16x16xf32> to vector<2x16xf32>
    %cst_22 = arith.constant dense<0.000000e+00> : vector<2x16xf32>
    %99 = tpu.matmul %97, %1, %cst_22 {dimension_numbers = #tpu.dot_dimension_numbers<[1], [0], [0], [1], [0, 0, 1, 1], [], []>} : vector<2x4xf32>, vector<4x16xf32>, vector<2x16xf32> -> vector<2x16xf32>
    %100 = arith.addf %98, %99 : vector<2x16xf32>
    %101 = vector.broadcast %19 : vector<1x16xf32> to vector<2x16xf32>
    %102 = arith.mulf %100, %101 : vector<2x16xf32>
    %103 = math.tanh %102 : vector<2x16xf32>
    %cst_23 = arith.constant 5.000000e-01 : f32
    %104 = vector.broadcast %cst_23 : f32 to vector<2x16xf32>
    %105 = arith.mulf %104, %103 : vector<2x16xf32>
    %cst_24 = arith.constant 5.000000e-01 : f32
    %106 = vector.broadcast %cst_24 : f32 to vector<2x16xf32>
    %107 = arith.addf %105, %106 : vector<2x16xf32>
    %108 = vector.extract_strided_slice %107 {offsets = [0, 0], sizes = [2, 4], strides = [1, 1]} : vector<2x16xf32> to vector<2x4xf32>
    %109 = vector.extract_strided_slice %107 {offsets = [0, 4], sizes = [2, 4], strides = [1, 1]} : vector<2x16xf32> to vector<2x4xf32>
    %110 = vector.extract_strided_slice %103 {offsets = [0, 8], sizes = [2, 4], strides = [1, 1]} : vector<2x16xf32> to vector<2x4xf32>
    %111 = vector.extract_strided_slice %107 {offsets = [0, 12], sizes = [2, 4], strides = [1, 1]} : vector<2x16xf32> to vector<2x4xf32>
    %112 = arith.mulf %109, %95 : vector<2x4xf32>
    %113 = arith.mulf %108, %110 : vector<2x4xf32>
    %114 = arith.addf %112, %113 : vector<2x4xf32>
    %115 = math.tanh %114 : vector<2x4xf32>
    %116 = arith.mulf %111, %115 : vector<2x4xf32>
    %117 = vector.extract_strided_slice %10 {offsets = [10, 0], sizes = [2, 16], strides = [1, 1]} : vector<16x16xf32> to vector<2x16xf32>
    %cst_25 = arith.constant dense<0.000000e+00> : vector<2x16xf32>
    %118 = tpu.matmul %116, %1, %cst_25 {dimension_numbers = #tpu.dot_dimension_numbers<[1], [0], [0], [1], [0, 0, 1, 1], [], []>} : vector<2x4xf32>, vector<4x16xf32>, vector<2x16xf32> -> vector<2x16xf32>
    %119 = arith.addf %117, %118 : vector<2x16xf32>
    %120 = vector.broadcast %19 : vector<1x16xf32> to vector<2x16xf32>
    %121 = arith.mulf %119, %120 : vector<2x16xf32>
    %122 = math.tanh %121 : vector<2x16xf32>
    %cst_26 = arith.constant 5.000000e-01 : f32
    %123 = vector.broadcast %cst_26 : f32 to vector<2x16xf32>
    %124 = arith.mulf %123, %122 : vector<2x16xf32>
    %cst_27 = arith.constant 5.000000e-01 : f32
    %125 = vector.broadcast %cst_27 : f32 to vector<2x16xf32>
    %126 = arith.addf %124, %125 : vector<2x16xf32>
    %127 = vector.extract_strided_slice %126 {offsets = [0, 0], sizes = [2, 4], strides = [1, 1]} : vector<2x16xf32> to vector<2x4xf32>
    %128 = vector.extract_strided_slice %126 {offsets = [0, 4], sizes = [2, 4], strides = [1, 1]} : vector<2x16xf32> to vector<2x4xf32>
    %129 = vector.extract_strided_slice %122 {offsets = [0, 8], sizes = [2, 4], strides = [1, 1]} : vector<2x16xf32> to vector<2x4xf32>
    %130 = vector.extract_strided_slice %126 {offsets = [0, 12], sizes = [2, 4], strides = [1, 1]} : vector<2x16xf32> to vector<2x4xf32>
    %131 = arith.mulf %128, %114 : vector<2x4xf32>
    %132 = arith.mulf %127, %129 : vector<2x4xf32>
    %133 = arith.addf %131, %132 : vector<2x4xf32>
    %134 = math.tanh %133 : vector<2x4xf32>
    %135 = arith.mulf %130, %134 : vector<2x4xf32>
    %136 = vector.extract_strided_slice %10 {offsets = [12, 0], sizes = [2, 16], strides = [1, 1]} : vector<16x16xf32> to vector<2x16xf32>
    %cst_28 = arith.constant dense<0.000000e+00> : vector<2x16xf32>
    %137 = tpu.matmul %135, %1, %cst_28 {dimension_numbers = #tpu.dot_dimension_numbers<[1], [0], [0], [1], [0, 0, 1, 1], [], []>} : vector<2x4xf32>, vector<4x16xf32>, vector<2x16xf32> -> vector<2x16xf32>
    %138 = arith.addf %136, %137 : vector<2x16xf32>
    %139 = vector.broadcast %19 : vector<1x16xf32> to vector<2x16xf32>
    %140 = arith.mulf %138, %139 : vector<2x16xf32>
    %141 = math.tanh %140 : vector<2x16xf32>
    %cst_29 = arith.constant 5.000000e-01 : f32
    %142 = vector.broadcast %cst_29 : f32 to vector<2x16xf32>
    %143 = arith.mulf %142, %141 : vector<2x16xf32>
    %cst_30 = arith.constant 5.000000e-01 : f32
    %144 = vector.broadcast %cst_30 : f32 to vector<2x16xf32>
    %145 = arith.addf %143, %144 : vector<2x16xf32>
    %146 = vector.extract_strided_slice %145 {offsets = [0, 0], sizes = [2, 4], strides = [1, 1]} : vector<2x16xf32> to vector<2x4xf32>
    %147 = vector.extract_strided_slice %145 {offsets = [0, 4], sizes = [2, 4], strides = [1, 1]} : vector<2x16xf32> to vector<2x4xf32>
    %148 = vector.extract_strided_slice %141 {offsets = [0, 8], sizes = [2, 4], strides = [1, 1]} : vector<2x16xf32> to vector<2x4xf32>
    %149 = vector.extract_strided_slice %145 {offsets = [0, 12], sizes = [2, 4], strides = [1, 1]} : vector<2x16xf32> to vector<2x4xf32>
    %150 = arith.mulf %147, %133 : vector<2x4xf32>
    %151 = arith.mulf %146, %148 : vector<2x4xf32>
    %152 = arith.addf %150, %151 : vector<2x4xf32>
    %153 = math.tanh %152 : vector<2x4xf32>
    %154 = arith.mulf %149, %153 : vector<2x4xf32>
    %155 = vector.extract_strided_slice %10 {offsets = [14, 0], sizes = [2, 16], strides = [1, 1]} : vector<16x16xf32> to vector<2x16xf32>
    %cst_31 = arith.constant dense<0.000000e+00> : vector<2x16xf32>
    %156 = tpu.matmul %154, %1, %cst_31 {dimension_numbers = #tpu.dot_dimension_numbers<[1], [0], [0], [1], [0, 0, 1, 1], [], []>} : vector<2x4xf32>, vector<4x16xf32>, vector<2x16xf32> -> vector<2x16xf32>
    %157 = arith.addf %155, %156 : vector<2x16xf32>
    %158 = vector.broadcast %19 : vector<1x16xf32> to vector<2x16xf32>
    %159 = arith.mulf %157, %158 : vector<2x16xf32>
    %160 = math.tanh %159 : vector<2x16xf32>
    %cst_32 = arith.constant 5.000000e-01 : f32
    %161 = vector.broadcast %cst_32 : f32 to vector<2x16xf32>
    %162 = arith.mulf %161, %160 : vector<2x16xf32>
    %cst_33 = arith.constant 5.000000e-01 : f32
    %163 = vector.broadcast %cst_33 : f32 to vector<2x16xf32>
    %164 = arith.addf %162, %163 : vector<2x16xf32>
    %165 = vector.extract_strided_slice %164 {offsets = [0, 0], sizes = [2, 4], strides = [1, 1]} : vector<2x16xf32> to vector<2x4xf32>
    %166 = vector.extract_strided_slice %164 {offsets = [0, 4], sizes = [2, 4], strides = [1, 1]} : vector<2x16xf32> to vector<2x4xf32>
    %167 = vector.extract_strided_slice %160 {offsets = [0, 8], sizes = [2, 4], strides = [1, 1]} : vector<2x16xf32> to vector<2x4xf32>
    %168 = vector.extract_strided_slice %164 {offsets = [0, 12], sizes = [2, 4], strides = [1, 1]} : vector<2x16xf32> to vector<2x4xf32>
    %169 = arith.mulf %166, %152 : vector<2x4xf32>
    %170 = arith.mulf %165, %167 : vector<2x4xf32>
    %171 = arith.addf %169, %170 : vector<2x4xf32>
    %172 = math.tanh %171 : vector<2x4xf32>
    %173 = arith.mulf %168, %172 : vector<2x4xf32>
    %174 = vector.shape_cast %40 : vector<2x4xf32> to vector<2x1x4xf32>
    %175 = vector.shape_cast %59 : vector<2x4xf32> to vector<2x1x4xf32>
    %176 = vector.shape_cast %78 : vector<2x4xf32> to vector<2x1x4xf32>
    %177 = vector.shape_cast %97 : vector<2x4xf32> to vector<2x1x4xf32>
    %178 = vector.shape_cast %116 : vector<2x4xf32> to vector<2x1x4xf32>
    %179 = vector.shape_cast %135 : vector<2x4xf32> to vector<2x1x4xf32>
    %180 = vector.shape_cast %154 : vector<2x4xf32> to vector<2x1x4xf32>
    %181 = vector.shape_cast %173 : vector<2x4xf32> to vector<2x1x4xf32>
    %182 = tpu.concatenate %174, %175, %176, %177, %178, %179, %180, %181 in 1 : vector<2x1x4xf32>, vector<2x1x4xf32>, vector<2x1x4xf32>, vector<2x1x4xf32>, vector<2x1x4xf32>, vector<2x1x4xf32>, vector<2x1x4xf32>, vector<2x1x4xf32> -> vector<2x8x4xf32>
    %183 = vector.shape_cast %182 : vector<2x8x4xf32> to vector<16x4xf32>
    %cst_34 = arith.constant dense<0.000000e+00> : vector<16x4xf32>
    %184 = tpu.matmul %183, %2, %cst_34 {dimension_numbers = #tpu.dot_dimension_numbers<[1], [0], [0], [1], [0, 0, 1, 1], [], []>} : vector<16x4xf32>, vector<4x4xf32>, vector<16x4xf32> -> vector<16x4xf32>
    %185 = vector.broadcast %3 : vector<1x4xf32> to vector<16x4xf32>
    %186 = arith.addf %184, %185 : vector<16x4xf32>
    %c0_35 = arith.constant 0 : index
    %c0_36 = arith.constant 0 : index
    %187 = vector.load %arg2[%c0_35, %c0_36] : memref<16x4xf32, #tpu.memory_space<vmem>>, vector<16x4xf32>
    tpu.vector_store %arg2[%c0_35, %c0_36], %186 {strides = array<i32>} : memref<16x4xf32, #tpu.memory_space<vmem>>, vector<16x4xf32>,
    return
  }
}

</mosaic_0001>

<llo_original>
// kernel: tpu_custom_call.1
$region0: #{tpu_custom_call.1}
  #allocation0 [shape = 'u32[]', space=smem, size = 0x4, offset = 0x4, fixed_abs, tag = 'smem constant byte address 0x4 - core index']
  #allocation1 [shape = 'u32[144,128]{1,0:T(1,128)}', space=vmem, size = 0x12000, scoped, tag = 'internal scratch']
  %s0 = inlined_call_operand.vmem [shape: s32[16,1], index: 0, kind: input, shape index: {}]
  %s1 = inlined_call_operand.vmem [shape: f32[16,16], index: 1, kind: input, shape index: {}]
  %s2 = inlined_call_operand.vmem [shape: f32[16,4], index: 2, kind: output, shape index: {}]
  %s3 = sld [smem:[#allocation0]]
  $region18: #{tpu_custom_call.1} parent=0
    _
  %s5 = ssub.s32 1, %s3
  %s6 = scalar_select 0, %s5, %s3
  // Predicated region
  $region2: #{tpu_custom_call.1} parent=0 // pred_check
    _
  $region3: #{tpu_custom_call.1} parent=0 // pred_check_branch
    %8 = sbr.rel (0) target = $region5
  $region4: #{tpu_custom_call.1} parent=0 // pred_region
    _
  $region5: #{tpu_custom_call.1} parent=0 // pred_fallthru
    _
  // Predicated region
  $region6: #{tpu_custom_call.1} parent=0 // pred_check
    _
  $region7: #{tpu_custom_call.1} parent=0 // pred_check_branch
    %10 = sbr.rel (0) target = $region9
  $region8: #{tpu_custom_call.1} parent=0 // pred_region
    _
  $region9: #{tpu_custom_call.1} parent=0 // pred_fallthru
    _
  %v11 = vld [vmem:[%s1] sm:$0xf]
  %v12 = vld [vmem:[%s1 + $0x4] sm:$0xf]
  %v13 = vld [vmem:[%s1 + $0x8] sm:$0xf]
  %v14 = vld [vmem:[%s1 + $0xc] sm:$0x1]
  %v15 = vld [vmem:[%s0] sm:$0xff]
  %v16 = vld [vmem:[%s0 + $0x8] sm:$0xff]
  %v17 = vlaneseq
  %v18 = vand.u32 %v17, 127
  %19 = vset.pattern.permute.xlu0 0
  %20 = vperm.xlu0 %19, %v15
  %v21 = vpop.permute.xlu0 %20
  %22 = vset.pattern.permute.xlu0 0
  %23 = vperm.xlu0 %22, %v16
  %v24 = vpop.permute.xlu0 %23
  %vm25 = vcmp.eq.s32.totalorder %v21, %v18
  %vm26 = vcmp.eq.s32.totalorder %v24, %v18
  %v27 = vsel %vm25, 1, 0
  %v28 = vsel %vm26, 1, 0
  %v29 = vcvt.s32.f32 %v27
  %v30 = vcvt.s32.f32 %v28
  %vm31 = vcmask 31744
  %v33 = vsel %vm31, %v29, 0
  %v36 = vsel %vm31, %v30, 0
  %vm38 = vcmask 1043456
  %v40 = vsel %vm38, %v11, 0
  %42 = vmatprep.subr.mxu0 0.0
  %43 = vmatpush1.msra.mxu0 0.0
  %44 = vmatprep.subr.mxu0 0.0
  %45 = vmatpush1.msra.mxu0 0.0
  %46 = vmatprep.subr.mxu0 0.0
  %47 = vmatpush1.msra.mxu0 0.0
  %48 = vmatprep.subr.mxu0 0.0
  %49 = vmatpush1.msra.mxu0 0.0
  %50 = vmatprep.subr.mxu0 0.0
  %51 = vmatpush1.msra.mxu0 0.0
  %52 = vmatprep.subr.mxu0 0.0
  %53 = vmatpush1.msra.mxu0 0.0
  %54 = vmatprep.subr.mxu0 0.0
  %55 = vmatpush1.msra.mxu0 0.0
  %56 = vmatprep.subr.mxu0 0.0
  %57 = vmatpush1.msra.mxu0 0.0
  %58 = vmatprep.subr.mxu0 0.0
  %59 = vmatpush1.msra.mxu0 0.0
  %60 = vmatprep.subr.mxu0 0.0
  %61 = vmatpush1.msra.mxu0 0.0
  %62 = vmatprep.subr.mxu0 0.0
  %63 = vmatpush1.msra.mxu0 0.0
  %64 = vmatprep.subr.mxu0 0.0
  %65 = vmatpush1.msra.mxu0 0.0
  %66 = vmatprep.subr.mxu0 0.0
  %67 = vmatpush1.msra.mxu0 0.0
  %68 = vmatprep.subr.mxu0 0.0
  %69 = vmatpush1.msra.mxu0 0.0
  %70 = vmatprep.subr.mxu0 0.0
  %71 = vmatpush1.msra.mxu0 0.0
  %72 = vmatprep.subr.mxu0 0.0
  %73 = vmatpush1.msra.mxu0 %v40
  %74 = vmatprep.subr.mxu0 0.0
  %75 = vmatpush2.msra.mxu0 0.0
  %76 = vmatprep.subr.mxu0 0.0
  %77 = vmatpush2.msra.mxu0 0.0
  %78 = vmatprep.subr.mxu0 0.0
  %79 = vmatpush2.msra.mxu0 0.0
  %80 = vmatprep.subr.mxu0 0.0
  %81 = vmatpush2.msra.mxu0 0.0
  %82 = vmatprep.subr.mxu0 0.0
  %83 = vmatpush2.msra.mxu0 0.0
  %84 = vmatprep.subr.mxu0 0.0
  %85 = vmatpush2.msra.mxu0 0.0
  %86 = vmatprep.subr.mxu0 0.0
  %87 = vmatpush2.msra.mxu0 0.0
  %88 = vmatprep.subr.mxu0 0.0
  %89 = vmatpush2.msra.mxu0 0.0
  %90 = vmatprep.subr.mxu0 0.0
  %91 = vmatpush2.msra.mxu0 0.0
  %92 = vmatprep.subr.mxu0 0.0
  %93 = vmatpush2.msra.mxu0 0.0
  %94 = vmatprep.subr.mxu0 0.0
  %95 = vmatpush2.msra.mxu0 0.0
  %96 = vmatprep.subr.mxu0 0.0
  %97 = vmatpush2.msra.mxu0 0.0
  %98 = vmatprep.subr.mxu0 0.0
  %99 = vmatpush2.msra.mxu0 0.0
  %100 = vmatprep.subr.mxu0 0.0
  %101 = vmatpush2.msra.mxu0 0.0
  %102 = vmatprep.subr.mxu0 0.0
  %103 = vmatpush2.msra.mxu0 0.0
  %104 = vmatprep.subr.mxu0 0.0
  %105 = vmatpush2.msra.mxu0 0.0
  %106 = vmatprep.mubr.f32.mxu0 0.0
  %107 = vmatmul.mubr.f32.gmra.mxu0 %v33
  %v108 = vpop.f32.mrf.mxu0
  %v109 = vadd.f32 0.0, %v108
  %v110 = vpop.f32.mrf.mxu0
  %111 = vmatprep.mubr.f32.mxu0 0.0
  %112 = vmatmul.mubr.f32.gmra.mxu0 %v36
  %v113 = vpop.f32.mrf.mxu0
  %v114 = vadd.f32 0.0, %v113
  %v115 = vpop.f32.mrf.mxu0
  %116 = vdwg.mxu0
  %vm117 = vcmp.ge.s32.totalorder %v18, 8
  %vm118 = vcmp.lt.s32.totalorder %v18, 12
  %vm119 = vmand %vm117, %vm118
  %v120 = vsel %vm119, 1.0, 0.5
  %v122 = vsel %vm31, 0.0, 0
  %v125 = vsel %vm38, %v12, 0
  %127 = vmatprep.subr.mxu0 0.0
  %128 = vmatpush1.msra.mxu0 0.0
  %129 = vmatprep.subr.mxu0 0.0
  %130 = vmatpush1.msra.mxu0 0.0
  %131 = vmatprep.subr.mxu0 0.0
  %132 = vmatpush1.msra.mxu0 0.0
  %133 = vmatprep.subr.mxu0 0.0
  %134 = vmatpush1.msra.mxu0 0.0
  %135 = vmatprep.subr.mxu0 0.0
  %136 = vmatpush1.msra.mxu0 0.0
  %137 = vmatprep.subr.mxu0 0.0
  %138 = vmatpush1.msra.mxu0 0.0
  %139 = vmatprep.subr.mxu0 0.0
  %140 = vmatpush1.msra.mxu0 0.0
  %141 = vmatprep.subr.mxu0 0.0
  %142 = vmatpush1.msra.mxu0 0.0
  %143 = vmatprep.subr.mxu0 0.0
  %144 = vmatpush1.msra.mxu0 0.0
  %145 = vmatprep.subr.mxu0 0.0
  %146 = vmatpush1.msra.mxu0 0.0
  %147 = vmatprep.subr.mxu0 0.0
  %148 = vmatpush1.msra.mxu0 0.0
  %149 = vmatprep.subr.mxu0 0.0
  %150 = vmatpush1.msra.mxu0 0.0
  %151 = vmatprep.subr.mxu0 0.0
  %152 = vmatpush1.msra.mxu0 0.0
  %153 = vmatprep.subr.mxu0 0.0
  %154 = vmatpush1.msra.mxu0 0.0
  %155 = vmatprep.subr.mxu0 0.0
  %156 = vmatpush1.msra.mxu0 0.0
  %157 = vmatprep.subr.mxu0 0.0
  %158 = vmatpush1.msra.mxu0 %v125
  %159 = vmatprep.subr.mxu0 0.0
  %160 = vmatpush2.msra.mxu0 0.0
  %161 = vmatprep.subr.mxu0 0.0
  %162 = vmatpush2.msra.mxu0 0.0
  %163 = vmatprep.subr.mxu0 0.0
  %164 = vmatpush2.msra.mxu0 0.0
  %165 = vmatprep.subr.mxu0 0.0
  %166 = vmatpush2.msra.mxu0 0.0
  %167 = vmatprep.subr.mxu0 0.0
  %168 = vmatpush2.msra.mxu0 0.0
  %169 = vmatprep.subr.mxu0 0.0
  %170 = vmatpush2.msra.mxu0 0.0
  %171 = vmatprep.subr.mxu0 0.0
  %172 = vmatpush2.msra.mxu0 0.0
  %173 = vmatprep.subr.mxu0 0.0
  %174 = vmatpush2.msra.mxu0 0.0
  %175 = vmatprep.subr.mxu0 0.0
  %176 = vmatpush2.msra.mxu0 0.0
  %177 = vmatprep.subr.mxu0 0.0
  %178 = vmatpush2.msra.mxu0 0.0
  %179 = vmatprep.subr.mxu0 0.0
  %180 = vmatpush2.msra.mxu0 0.0
  %181 = vmatprep.subr.mxu0 0.0
  %182 = vmatpush2.msra.mxu0 0.0
  %183 = vmatprep.subr.mxu0 0.0
  %184 = vmatpush2.msra.mxu0 0.0
  %185 = vmatprep.subr.mxu0 0.0
  %186 = vmatpush2.msra.mxu0 0.0
  %187 = vmatprep.subr.mxu0 0.0
  %188 = vmatpush2.msra.mxu0 0.0
  %189 = vmatprep.subr.mxu0 0.0
  %190 = vmatpush2.msra.mxu0 0.0
  %191 = vmatprep.mubr.f32.mxu0 0.0
  %192 = vmatmul.mubr.f32.gmra.mxu0 %v122
  %v193 = vpop.f32.mrf.mxu0
  %v194 = vadd.f32 0.0, %v193
  %v195 = vpop.f32.mrf.mxu0
  %196 = vdwg.mxu0
  %v197 = vadd.f32 %v109, %v194
  %v198 = vmul.f32 %v197, %v120
  %v199 = vtanh.pop %v198
  %v200 = vmul.f32 %v199, 0.5
  %v201 = vadd.f32 %v200, 0.5
  %v202 = vmul.f32 %v201, 0.0
  %204 = vrot.lane.b32.xlu0 %v199, 120
  %v205 = vpop.permute.xlu0 %204
  %v207 = vmul.f32 %v201, %v205
  %209 = vrot.lane.b32.xlu0 %v207, 4
  %v210 = vpop.permute.xlu0 %209
  %v212 = vadd.f32 %v202, %v210
  %v213 = vtanh.pop %v212
  %215 = vrot.lane.b32.xlu0 %v213, 8
  %v216 = vpop.permute.xlu0 %215
  %v218 = vmul.f32 %v201, %v216
  %220 = vrot.lane.b32.xlu0 %v218, 116
  %v221 = vpop.permute.xlu0 %220
  %v222 = vsel %vm31, %v221, 0
  %224 = vmatprep.subr.mxu0 0.0
  %225 = vmatpush1.msra.mxu0 0.0
  %226 = vmatprep.subr.mxu0 0.0
  %227 = vmatpush1.msra.mxu0 0.0
  %228 = vmatprep.subr.mxu0 0.0
  %229 = vmatpush1.msra.mxu0 0.0
  %230 = vmatprep.subr.mxu0 0.0
  %231 = vmatpush1.msra.mxu0 0.0
  %232 = vmatprep.subr.mxu0 0.0
  %233 = vmatpush1.msra.mxu0 0.0
  %234 = vmatprep.subr.mxu0 0.0
  %235 = vmatpush1.msra.mxu0 0.0
  %236 = vmatprep.subr.mxu0 0.0
  %237 = vmatpush1.msra.mxu0 0.0
  %238 = vmatprep.subr.mxu0 0.0
  %239 = vmatpush1.msra.mxu0 0.0
  %240 = vmatprep.subr.mxu0 0.0
  %241 = vmatpush1.msra.mxu0 0.0
  %242 = vmatprep.subr.mxu0 0.0
  %243 = vmatpush1.msra.mxu0 0.0
  %244 = vmatprep.subr.mxu0 0.0
  %245 = vmatpush1.msra.mxu0 0.0
  %246 = vmatprep.subr.mxu0 0.0
  %247 = vmatpush1.msra.mxu0 0.0
  %248 = vmatprep.subr.mxu0 0.0
  %249 = vmatpush1.msra.mxu0 0.0
  %250 = vmatprep.subr.mxu0 0.0
  %251 = vmatpush1.msra.mxu0 0.0
  %252 = vmatprep.subr.mxu0 0.0
  %253 = vmatpush1.msra.mxu0 0.0
  %254 = vmatprep.subr.mxu0 0.0
  %255 = vmatpush1.msra.mxu0 %v125
  %256 = vmatprep.subr.mxu0 0.0
  %257 = vmatpush2.msra.mxu0 0.0
  %258 = vmatprep.subr.mxu0 0.0
  %259 = vmatpush2.msra.mxu0 0.0
  %260 = vmatprep.subr.mxu0 0.0
  %261 = vmatpush2.msra.mxu0 0.0
  %262 = vmatprep.subr.mxu0 0.0
  %263 = vmatpush2.msra.mxu0 0.0
  %264 = vmatprep.subr.mxu0 0.0
  %265 = vmatpush2.msra.mxu0 0.0
  %266 = vmatprep.subr.mxu0 0.0
  %267 = vmatpush2.msra.mxu0 0.0
  %268 = vmatprep.subr.mxu0 0.0
  %269 = vmatpush2.msra.mxu0 0.0
  %270 = vmatprep.subr.mxu0 0.0
  %271 = vmatpush2.msra.mxu0 0.0
  %272 = vmatprep.subr.mxu0 0.0
  %273 = vmatpush2.msra.mxu0 0.0
  %274 = vmatprep.subr.mxu0 0.0
  %275 = vmatpush2.msra.mxu0 0.0
  %276 = vmatprep.subr.mxu0 0.0
  %277 = vmatpush2.msra.mxu0 0.0
  %278 = vmatprep.subr.mxu0 0.0
  %279 = vmatpush2.msra.mxu0 0.0
  %280 = vmatprep.subr.mxu0 0.0
  %281 = vmatpush2.msra.mxu0 0.0
  %282 = vmatprep.subr.mxu0 0.0
  %283 = vmatpush2.msra.mxu0 0.0
  %284 = vmatprep.subr.mxu0 0.0
  %285 = vmatpush2.msra.mxu0 0.0
  %286 = vmatprep.subr.mxu0 0.0
  %287 = vmatpush2.msra.mxu0 0.0
  %288 = vmatprep.mubr.f32.mxu0 0.0
  %289 = vmatmul.mubr.f32.gmra.mxu0 %v222
  %v290 = vpop.f32.mrf.mxu0
  %v291 = vadd.f32 0.0, %v290
  %v292 = vpop.f32.mrf.mxu0
  %293 = vdwg.mxu0
  %v295 = vrot.slane %v291, 6
  %v297 = vadd.f32 %v109, %v295
  %v298 = vmul.f32 %v297, %v120
  %v299 = vtanh.pop %v298
  %v300 = vmul.f32 %v299, 0.5
  %v301 = vadd.f32 %v300, 0.5
  %v303 = vrot.slane %v212, 6
  %v305 = vmul.f32 %v301, %v303
  %307 = vrot.lane.b32.xlu0 %v299, 120
  %v308 = vpop.permute.xlu0 %307
  %v310 = vmul.f32 %v301, %v308
  %312 = vrot.lane.b32.xlu0 %v310, 4
  %v313 = vpop.permute.xlu0 %312
  %v315 = vadd.f32 %v305, %v313
  %v316 = vtanh.pop %v315
  %318 = vrot.lane.b32.xlu0 %v316, 8
  %v319 = vpop.permute.xlu0 %318
  %v321 = vmul.f32 %v301, %v319
  %v323 = vrot.slane %v321, 2
  %324 = vrot.lane.b32.xlu0 %v323, 116
  %v325 = vpop.permute.xlu0 %324
  %v326 = vsel %vm31, %v325, 0
  %328 = vmatprep.subr.mxu0 0.0
  %329 = vmatpush1.msra.mxu0 0.0
  %330 = vmatprep.subr.mxu0 0.0
  %331 = vmatpush1.msra.mxu0 0.0
  %332 = vmatprep.subr.mxu0 0.0
  %333 = vmatpush1.msra.mxu0 0.0
  %334 = vmatprep.subr.mxu0 0.0
  %335 = vmatpush1.msra.mxu0 0.0
  %336 = vmatprep.subr.mxu0 0.0
  %337 = vmatpush1.msra.mxu0 0.0
  %338 = vmatprep.subr.mxu0 0.0
  %339 = vmatpush1.msra.mxu0 0.0
  %340 = vmatprep.subr.mxu0 0.0
  %341 = vmatpush1.msra.mxu0 0.0
  %342 = vmatprep.subr.mxu0 0.0
  %343 = vmatpush1.msra.mxu0 0.0
  %344 = vmatprep.subr.mxu0 0.0
  %345 = vmatpush1.msra.mxu0 0.0
  %346 = vmatprep.subr.mxu0 0.0
  %347 = vmatpush1.msra.mxu0 0.0
  %348 = vmatprep.subr.mxu0 0.0
  %349 = vmatpush1.msra.mxu0 0.0
  %350 = vmatprep.subr.mxu0 0.0
  %351 = vmatpush1.msra.mxu0 0.0
  %352 = vmatprep.subr.mxu0 0.0
  %353 = vmatpush1.msra.mxu0 0.0
  %354 = vmatprep.subr.mxu0 0.0
  %355 = vmatpush1.msra.mxu0 0.0
  %356 = vmatprep.subr.mxu0 0.0
  %357 = vmatpush1.msra.mxu0 0.0
  %358 = vmatprep.subr.mxu0 0.0
  %359 = vmatpush1.msra.mxu0 %v125
  %360 = vmatprep.subr.mxu0 0.0
  %361 = vmatpush2.msra.mxu0 0.0
  %362 = vmatprep.subr.mxu0 0.0
  %363 = vmatpush2.msra.mxu0 0.0
  %364 = vmatprep.subr.mxu0 0.0
  %365 = vmatpush2.msra.mxu0 0.0
  %366 = vmatprep.subr.mxu0 0.0
  %367 = vmatpush2.msra.mxu0 0.0
  %368 = vmatprep.subr.mxu0 0.0
  %369 = vmatpush2.msra.mxu0 0.0
  %370 = vmatprep.subr.mxu0 0.0
  %371 = vmatpush2.msra.mxu0 0.0
  %372 = vmatprep.subr.mxu0 0.0
  %373 = vmatpush2.msra.mxu0 0.0
  %374 = vmatprep.subr.mxu0 0.0
  %375 = vmatpush2.msra.mxu0 0.0
  %376 = vmatprep.subr.mxu0 0.0
  %377 = vmatpush2.msra.mxu0 0.0
  %378 = vmatprep.subr.mxu0 0.0
  %379 = vmatpush2.msra.mxu0 0.0
  %380 = vmatprep.subr.mxu0 0.0
  %381 = vmatpush2.msra.mxu0 0.0
  %382 = vmatprep.subr.mxu0 0.0
  %383 = vmatpush2.msra.mxu0 0.0
  %384 = vmatprep.subr.mxu0 0.0
  %385 = vmatpush2.msra.mxu0 0.0
  %386 = vmatprep.subr.mxu0 0.0
  %387 = vmatpush2.msra.mxu0 0.0
  %388 = vmatprep.subr.mxu0 0.0
  %389 = vmatpush2.msra.mxu0 0.0
  %390 = vmatprep.subr.mxu0 0.0
  %391 = vmatpush2.msra.mxu0 0.0
  %392 = vmatprep.mubr.f32.mxu0 0.0
  %393 = vmatmul.mubr.f32.gmra.mxu0 %v326
  %v394 = vpop.f32.mrf.mxu0
  %v395 = vadd.f32 0.0, %v394
  %v396 = vpop.f32.mrf.mxu0
  %397 = vdwg.mxu0
  %v399 = vrot.slane %v395, 4
  %v401 = vadd.f32 %v109, %v399
  %v402 = vmul.f32 %v401, %v120
  %v403 = vtanh.pop %v402
  %v404 = vmul.f32 %v403, 0.5
  %v405 = vadd.f32 %v404, 0.5
  %v407 = vrot.slane %v315, 6
  %v409 = vmul.f32 %v405, %v407
  %411 = vrot.lane.b32.xlu0 %v403, 120
  %v412 = vpop.permute.xlu0 %411
  %v414 = vmul.f32 %v405, %v412
  %416 = vrot.lane.b32.xlu0 %v414, 4
  %v417 = vpop.permute.xlu0 %416
  %v419 = vadd.f32 %v409, %v417
  %v420 = vtanh.pop %v419
  %422 = vrot.lane.b32.xlu0 %v420, 8
  %v423 = vpop.permute.xlu0 %422
  %v425 = vmul.f32 %v405, %v423
  %v427 = vrot.slane %v425, 4
  %428 = vrot.lane.b32.xlu0 %v427, 116
  %v429 = vpop.permute.xlu0 %428
  %v430 = vsel %vm31, %v429, 0
  %432 = vmatprep.subr.mxu0 0.0
  %433 = vmatpush1.msra.mxu0 0.0
  %434 = vmatprep.subr.mxu0 0.0
  %435 = vmatpush1.msra.mxu0 0.0
  %436 = vmatprep.subr.mxu0 0.0
  %437 = vmatpush1.msra.mxu0 0.0
  %438 = vmatprep.subr.mxu0 0.0
  %439 = vmatpush1.msra.mxu0 0.0
  %440 = vmatprep.subr.mxu0 0.0
  %441 = vmatpush1.msra.mxu0 0.0
  %442 = vmatprep.subr.mxu0 0.0
  %443 = vmatpush1.msra.mxu0 0.0
  %444 = vmatprep.subr.mxu0 0.0
  %445 = vmatpush1.msra.mxu0 0.0
  %446 = vmatprep.subr.mxu0 0.0
  %447 = vmatpush1.msra.mxu0 0.0
  %448 = vmatprep.subr.mxu0 0.0
  %449 = vmatpush1.msra.mxu0 0.0
  %450 = vmatprep.subr.mxu0 0.0
  %451 = vmatpush1.msra.mxu0 0.0
  %452 = vmatprep.subr.mxu0 0.0
  %453 = vmatpush1.msra.mxu0 0.0
  %454 = vmatprep.subr.mxu0 0.0
  %455 = vmatpush1.msra.mxu0 0.0
  %456 = vmatprep.subr.mxu0 0.0
  %457 = vmatpush1.msra.mxu0 0.0
  %458 = vmatprep.subr.mxu0 0.0
  %459 = vmatpush1.msra.mxu0 0.0
  %460 = vmatprep.subr.mxu0 0.0
  %461 = vmatpush1.msra.mxu0 0.0
  %462 = vmatprep.subr.mxu0 0.0
  %463 = vmatpush1.msra.mxu0 %v125
  %464 = vmatprep.subr.mxu0 0.0
  %465 = vmatpush2.msra.mxu0 0.0
  %466 = vmatprep.subr.mxu0 0.0
  %467 = vmatpush2.msra.mxu0 0.0
  %468 = vmatprep.subr.mxu0 0.0
  %469 = vmatpush2.msra.mxu0 0.0
  %470 = vmatprep.subr.mxu0 0.0
  %471 = vmatpush2.msra.mxu0 0.0
  %472 = vmatprep.subr.mxu0 0.0
  %473 = vmatpush2.msra.mxu0 0.0
  %474 = vmatprep.subr.mxu0 0.0
  %475 = vmatpush2.msra.mxu0 0.0
  %476 = vmatprep.subr.mxu0 0.0
  %477 = vmatpush2.msra.mxu0 0.0
  %478 = vmatprep.subr.mxu0 0.0
  %479 = vmatpush2.msra.mxu0 0.0
  %480 = vmatprep.subr.mxu0 0.0
  %481 = vmatpush2.msra.mxu0 0.0
  %482 = vmatprep.subr.mxu0 0.0
  %483 = vmatpush2.msra.mxu0 0.0
  %484 = vmatprep.subr.mxu0 0.0
  %485 = vmatpush2.msra.mxu0 0.0
  %486 = vmatprep.subr.mxu0 0.0
  %487 = vmatpush2.msra.mxu0 0.0
  %488 = vmatprep.subr.mxu0 0.0
  %489 = vmatpush2.msra.mxu0 0.0
  %490 = vmatprep.subr.mxu0 0.0
  %491 = vmatpush2.msra.mxu0 0.0
  %492 = vmatprep.subr.mxu0 0.0
  %493 = vmatpush2.msra.mxu0 0.0
  %494 = vmatprep.subr.mxu0 0.0
  %495 = vmatpush2.msra.mxu0 0.0
  %496 = vmatprep.mubr.f32.mxu0 0.0
  %497 = vmatmul.mubr.f32.gmra.mxu0 %v430
  %v498 = vpop.f32.mrf.mxu0
  %v499 = vadd.f32 0.0, %v498
  %v500 = vpop.f32.mrf.mxu0
  %501 = vdwg.mxu0
  %v503 = vrot.slane %v499, 2
  %v505 = vadd.f32 %v109, %v503
  %v506 = vmul.f32 %v505, %v120
  %v507 = vtanh.pop %v506
  %v508 = vmul.f32 %v507, 0.5
  %v509 = vadd.f32 %v508, 0.5
  %v511 = vrot.slane %v419, 6
  %v513 = vmul.f32 %v509, %v511
  %515 = vrot.lane.b32.xlu0 %v507, 120
  %v516 = vpop.permute.xlu0 %515
  %v518 = vmul.f32 %v509, %v516
  %520 = vrot.lane.b32.xlu0 %v518, 4
  %v521 = vpop.permute.xlu0 %520
  %v523 = vadd.f32 %v513, %v521
  %v524 = vtanh.pop %v523
  %526 = vrot.lane.b32.xlu0 %v524, 8
  %v527 = vpop.permute.xlu0 %526
  %v529 = vmul.f32 %v509, %v527
  %v531 = vrot.slane %v529, 6
  %532 = vrot.lane.b32.xlu0 %v531, 116
  %v533 = vpop.permute.xlu0 %532
  %v534 = vsel %vm31, %v533, 0
  %536 = vmatprep.subr.mxu0 0.0
  %537 = vmatpush1.msra.mxu0 0.0
  %538 = vmatprep.subr.mxu0 0.0
  %539 = vmatpush1.msra.mxu0 0.0
  %540 = vmatprep.subr.mxu0 0.0
  %541 = vmatpush1.msra.mxu0 0.0
  %542 = vmatprep.subr.mxu0 0.0
  %543 = vmatpush1.msra.mxu0 0.0
  %544 = vmatprep.subr.mxu0 0.0
  %545 = vmatpush1.msra.mxu0 0.0
  %546 = vmatprep.subr.mxu0 0.0
  %547 = vmatpush1.msra.mxu0 0.0
  %548 = vmatprep.subr.mxu0 0.0
  %549 = vmatpush1.msra.mxu0 0.0
  %550 = vmatprep.subr.mxu0 0.0
  %551 = vmatpush1.msra.mxu0 0.0
  %552 = vmatprep.subr.mxu0 0.0
  %553 = vmatpush1.msra.mxu0 0.0
  %554 = vmatprep.subr.mxu0 0.0
  %555 = vmatpush1.msra.mxu0 0.0
  %556 = vmatprep.subr.mxu0 0.0
  %557 = vmatpush1.msra.mxu0 0.0
  %558 = vmatprep.subr.mxu0 0.0
  %559 = vmatpush1.msra.mxu0 0.0
  %560 = vmatprep.subr.mxu0 0.0
  %561 = vmatpush1.msra.mxu0 0.0
  %562 = vmatprep.subr.mxu0 0.0
  %563 = vmatpush1.msra.mxu0 0.0
  %564 = vmatprep.subr.mxu0 0.0
  %565 = vmatpush1.msra.mxu0 0.0
  %566 = vmatprep.subr.mxu0 0.0
  %567 = vmatpush1.msra.mxu0 %v125
  %568 = vmatprep.subr.mxu0 0.0
  %569 = vmatpush2.msra.mxu0 0.0
  %570 = vmatprep.subr.mxu0 0.0
  %571 = vmatpush2.msra.mxu0 0.0
  %572 = vmatprep.subr.mxu0 0.0
  %573 = vmatpush2.msra.mxu0 0.0
  %574 = vmatprep.subr.mxu0 0.0
  %575 = vmatpush2.msra.mxu0 0.0
  %576 = vmatprep.subr.mxu0 0.0
  %577 = vmatpush2.msra.mxu0 0.0
  %578 = vmatprep.subr.mxu0 0.0
  %579 = vmatpush2.msra.mxu0 0.0
  %580 = vmatprep.subr.mxu0 0.0
  %581 = vmatpush2.msra.mxu0 0.0
  %582 = vmatprep.subr.mxu0 0.0
  %583 = vmatpush2.msra.mxu0 0.0
  %584 = vmatprep.subr.mxu0 0.0
  %585 = vmatpush2.msra.mxu0 0.0
  %586 = vmatprep.subr.mxu0 0.0
  %587 = vmatpush2.msra.mxu0 0.0
  %588 = vmatprep.subr.mxu0 0.0
  %589 = vmatpush2.msra.mxu0 0.0
  %590 = vmatprep.subr.mxu0 0.0
  %591 = vmatpush2.msra.mxu0 0.0
  %592 = vmatprep.subr.mxu0 0.0
  %593 = vmatpush2.msra.mxu0 0.0
  %594 = vmatprep.subr.mxu0 0.0
  %595 = vmatpush2.msra.mxu0 0.0
  %596 = vmatprep.subr.mxu0 0.0
  %597 = vmatpush2.msra.mxu0 0.0
  %598 = vmatprep.subr.mxu0 0.0
  %599 = vmatpush2.msra.mxu0 0.0
  %600 = vmatprep.mubr.f32.mxu0 0.0
  %601 = vmatmul.mubr.f32.gmra.mxu0 %v534
  %v602 = vpop.f32.mrf.mxu0
  %v603 = vadd.f32 0.0, %v602
  %v604 = vpop.f32.mrf.mxu0
  %605 = vdwg.mxu0
  %v606 = vadd.f32 %v114, %v603
  %v607 = vmul.f32 %v606, %v120
  %v608 = vtanh.pop %v607
  %v609 = vmul.f32 %v608, 0.5
  %v610 = vadd.f32 %v609, 0.5
  %v612 = vrot.slane %v523, 6
  %v614 = vmul.f32 %v610, %v612
  %616 = vrot.lane.b32.xlu0 %v608, 120
  %v617 = vpop.permute.xlu0 %616
  %v619 = vmul.f32 %v610, %v617
  %621 = vrot.lane.b32.xlu0 %v619, 4
  %v622 = vpop.permute.xlu0 %621
  %v624 = vadd.f32 %v614, %v622
  %v625 = vtanh.pop %v624
  %627 = vrot.lane.b32.xlu0 %v625, 8
  %v628 = vpop.permute.xlu0 %627
  %v630 = vmul.f32 %v610, %v628
  %632 = vrot.lane.b32.xlu0 %v630, 116
  %v633 = vpop.permute.xlu0 %632
  %v634 = vsel %vm31, %v633, 0
  %636 = vmatprep.subr.mxu0 0.0
  %637 = vmatpush1.msra.mxu0 0.0
  %638 = vmatprep.subr.mxu0 0.0
  %639 = vmatpush1.msra.mxu0 0.0
  %640 = vmatprep.subr.mxu0 0.0
  %641 = vmatpush1.msra.mxu0 0.0
  %642 = vmatprep.subr.mxu0 0.0
  %643 = vmatpush1.msra.mxu0 0.0
  %644 = vmatprep.subr.mxu0 0.0
  %645 = vmatpush1.msra.mxu0 0.0
  %646 = vmatprep.subr.mxu0 0.0
  %647 = vmatpush1.msra.mxu0 0.0
  %648 = vmatprep.subr.mxu0 0.0
  %649 = vmatpush1.msra.mxu0 0.0
  %650 = vmatprep.subr.mxu0 0.0
  %651 = vmatpush1.msra.mxu0 0.0
  %652 = vmatprep.subr.mxu0 0.0
  %653 = vmatpush1.msra.mxu0 0.0
  %654 = vmatprep.subr.mxu0 0.0
  %655 = vmatpush1.msra.mxu0 0.0
  %656 = vmatprep.subr.mxu0 0.0
  %657 = vmatpush1.msra.mxu0 0.0
  %658 = vmatprep.subr.mxu0 0.0
  %659 = vmatpush1.msra.mxu0 0.0
  %660 = vmatprep.subr.mxu0 0.0
  %661 = vmatpush1.msra.mxu0 0.0
  %662 = vmatprep.subr.mxu0 0.0
  %663 = vmatpush1.msra.mxu0 0.0
  %664 = vmatprep.subr.mxu0 0.0
  %665 = vmatpush1.msra.mxu0 0.0
  %666 = vmatprep.subr.mxu0 0.0
  %667 = vmatpush1.msra.mxu0 %v125
  %668 = vmatprep.subr.mxu0 0.0
  %669 = vmatpush2.msra.mxu0 0.0
  %670 = vmatprep.subr.mxu0 0.0
  %671 = vmatpush2.msra.mxu0 0.0
  %672 = vmatprep.subr.mxu0 0.0
  %673 = vmatpush2.msra.mxu0 0.0
  %674 = vmatprep.subr.mxu0 0.0
  %675 = vmatpush2.msra.mxu0 0.0
  %676 = vmatprep.subr.mxu0 0.0
  %677 = vmatpush2.msra.mxu0 0.0
  %678 = vmatprep.subr.mxu0 0.0
  %679 = vmatpush2.msra.mxu0 0.0
  %680 = vmatprep.subr.mxu0 0.0
  %681 = vmatpush2.msra.mxu0 0.0
  %682 = vmatprep.subr.mxu0 0.0
  %683 = vmatpush2.msra.mxu0 0.0
  %684 = vmatprep.subr.mxu0 0.0
  %685 = vmatpush2.msra.mxu0 0.0
  %686 = vmatprep.subr.mxu0 0.0
  %687 = vmatpush2.msra.mxu0 0.0
  %688 = vmatprep.subr.mxu0 0.0
  %689 = vmatpush2.msra.mxu0 0.0
  %690 = vmatprep.subr.mxu0 0.0
  %691 = vmatpush2.msra.mxu0 0.0
  %692 = vmatprep.subr.mxu0 0.0
  %693 = vmatpush2.msra.mxu0 0.0
  %694 = vmatprep.subr.mxu0 0.0
  %695 = vmatpush2.msra.mxu0 0.0
  %696 = vmatprep.subr.mxu0 0.0
  %697 = vmatpush2.msra.mxu0 0.0
  %698 = vmatprep.subr.mxu0 0.0
  %699 = vmatpush2.msra.mxu0 0.0
  %700 = vmatprep.mubr.f32.mxu0 0.0
  %701 = vmatmul.mubr.f32.gmra.mxu0 %v634
  %v702 = vpop.f32.mrf.mxu0
  %v703 = vadd.f32 0.0, %v702
  %v704 = vpop.f32.mrf.mxu0
  %705 = vdwg.mxu0
  %v707 = vrot.slane %v703, 6
  %v709 = vadd.f32 %v114, %v707
  %v710 = vmul.f32 %v709, %v120
  %v711 = vtanh.pop %v710
  %v712 = vmul.f32 %v711, 0.5
  %v713 = vadd.f32 %v712, 0.5
  %v715 = vrot.slane %v624, 6
  %v717 = vmul.f32 %v713, %v715
  %719 = vrot.lane.b32.xlu0 %v711, 120
  %v720 = vpop.permute.xlu0 %719
  %v722 = vmul.f32 %v713, %v720
  %724 = vrot.lane.b32.xlu0 %v722, 4
  %v725 = vpop.permute.xlu0 %724
  %v727 = vadd.f32 %v717, %v725
  %v728 = vtanh.pop %v727
  %730 = vrot.lane.b32.xlu0 %v728, 8
  %v731 = vpop.permute.xlu0 %730
  %v733 = vmul.f32 %v713, %v731
  %v735 = vrot.slane %v733, 2
  %736 = vrot.lane.b32.xlu0 %v735, 116
  %v737 = vpop.permute.xlu0 %736
  %v738 = vsel %vm31, %v737, 0
  %740 = vmatprep.subr.mxu0 0.0
  %741 = vmatpush1.msra.mxu0 0.0
  %742 = vmatprep.subr.mxu0 0.0
  %743 = vmatpush1.msra.mxu0 0.0
  %744 = vmatprep.subr.mxu0 0.0
  %745 = vmatpush1.msra.mxu0 0.0
  %746 = vmatprep.subr.mxu0 0.0
  %747 = vmatpush1.msra.mxu0 0.0
  %748 = vmatprep.subr.mxu0 0.0
  %749 = vmatpush1.msra.mxu0 0.0
  %750 = vmatprep.subr.mxu0 0.0
  %751 = vmatpush1.msra.mxu0 0.0
  %752 = vmatprep.subr.mxu0 0.0
  %753 = vmatpush1.msra.mxu0 0.0
  %754 = vmatprep.subr.mxu0 0.0
  %755 = vmatpush1.msra.mxu0 0.0
  %756 = vmatprep.subr.mxu0 0.0
  %757 = vmatpush1.msra.mxu0 0.0
  %758 = vmatprep.subr.mxu0 0.0
  %759 = vmatpush1.msra.mxu0 0.0
  %760 = vmatprep.subr.mxu0 0.0
  %761 = vmatpush1.msra.mxu0 0.0
  %762 = vmatprep.subr.mxu0 0.0
  %763 = vmatpush1.msra.mxu0 0.0
  %764 = vmatprep.subr.mxu0 0.0
  %765 = vmatpush1.msra.mxu0 0.0
  %766 = vmatprep.subr.mxu0 0.0
  %767 = vmatpush1.msra.mxu0 0.0
  %768 = vmatprep.subr.mxu0 0.0
  %769 = vmatpush1.msra.mxu0 0.0
  %770 = vmatprep.subr.mxu0 0.0
  %771 = vmatpush1.msra.mxu0 %v125
  %772 = vmatprep.subr.mxu0 0.0
  %773 = vmatpush2.msra.mxu0 0.0
  %774 = vmatprep.subr.mxu0 0.0
  %775 = vmatpush2.msra.mxu0 0.0
  %776 = vmatprep.subr.mxu0 0.0
  %777 = vmatpush2.msra.mxu0 0.0
  %778 = vmatprep.subr.mxu0 0.0
  %779 = vmatpush2.msra.mxu0 0.0
  %780 = vmatprep.subr.mxu0 0.0
  %781 = vmatpush2.msra.mxu0 0.0
  %782 = vmatprep.subr.mxu0 0.0
  %783 = vmatpush2.msra.mxu0 0.0
  %784 = vmatprep.subr.mxu0 0.0
  %785 = vmatpush2.msra.mxu0 0.0
  %786 = vmatprep.subr.mxu0 0.0
  %787 = vmatpush2.msra.mxu0 0.0
  %788 = vmatprep.subr.mxu0 0.0
  %789 = vmatpush2.msra.mxu0 0.0
  %790 = vmatprep.subr.mxu0 0.0
  %791 = vmatpush2.msra.mxu0 0.0
  %792 = vmatprep.subr.mxu0 0.0
  %793 = vmatpush2.msra.mxu0 0.0
  %794 = vmatprep.subr.mxu0 0.0
  %795 = vmatpush2.msra.mxu0 0.0
  %796 = vmatprep.subr.mxu0 0.0
  %797 = vmatpush2.msra.mxu0 0.0
  %798 = vmatprep.subr.mxu0 0.0
  %799 = vmatpush2.msra.mxu0 0.0
  %800 = vmatprep.subr.mxu0 0.0
  %801 = vmatpush2.msra.mxu0 0.0
  %802 = vmatprep.subr.mxu0 0.0
  %803 = vmatpush2.msra.mxu0 0.0
  %804 = vmatprep.mubr.f32.mxu0 0.0
  %805 = vmatmul.mubr.f32.gmra.mxu0 %v738
  %v806 = vpop.f32.mrf.mxu0
  %v807 = vadd.f32 0.0, %v806
  %v808 = vpop.f32.mrf.mxu0
  %809 = vdwg.mxu0
  %v811 = vrot.slane %v807, 4
  %v813 = vadd.f32 %v114, %v811
  %v814 = vmul.f32 %v813, %v120
  %v815 = vtanh.pop %v814
  %v816 = vmul.f32 %v815, 0.5
  %v817 = vadd.f32 %v816, 0.5
  %v819 = vrot.slane %v727, 6
  %v821 = vmul.f32 %v817, %v819
  %823 = vrot.lane.b32.xlu0 %v815, 120
  %v824 = vpop.permute.xlu0 %823
  %v826 = vmul.f32 %v817, %v824
  %828 = vrot.lane.b32.xlu0 %v826, 4
  %v829 = vpop.permute.xlu0 %828
  %v831 = vadd.f32 %v821, %v829
  %v832 = vtanh.pop %v831
  %834 = vrot.lane.b32.xlu0 %v832, 8
  %v835 = vpop.permute.xlu0 %834
  %v837 = vmul.f32 %v817, %v835
  %v839 = vrot.slane %v837, 4
  %840 = vrot.lane.b32.xlu0 %v839, 116
  %v841 = vpop.permute.xlu0 %840
  %v842 = vsel %vm31, %v841, 0
  %844 = vmatprep.subr.mxu0 0.0
  %845 = vmatpush1.msra.mxu0 0.0
  %846 = vmatprep.subr.mxu0 0.0
  %847 = vmatpush1.msra.mxu0 0.0
  %848 = vmatprep.subr.mxu0 0.0
  %849 = vmatpush1.msra.mxu0 0.0
  %850 = vmatprep.subr.mxu0 0.0
  %851 = vmatpush1.msra.mxu0 0.0
  %852 = vmatprep.subr.mxu0 0.0
  %853 = vmatpush1.msra.mxu0 0.0
  %854 = vmatprep.subr.mxu0 0.0
  %855 = vmatpush1.msra.mxu0 0.0
  %856 = vmatprep.subr.mxu0 0.0
  %857 = vmatpush1.msra.mxu0 0.0
  %858 = vmatprep.subr.mxu0 0.0
  %859 = vmatpush1.msra.mxu0 0.0
  %860 = vmatprep.subr.mxu0 0.0
  %861 = vmatpush1.msra.mxu0 0.0
  %862 = vmatprep.subr.mxu0 0.0
  %863 = vmatpush1.msra.mxu0 0.0
  %864 = vmatprep.subr.mxu0 0.0
  %865 = vmatpush1.msra.mxu0 0.0
  %866 = vmatprep.subr.mxu0 0.0
  %867 = vmatpush1.msra.mxu0 0.0
  %868 = vmatprep.subr.mxu0 0.0
  %869 = vmatpush1.msra.mxu0 0.0
  %870 = vmatprep.subr.mxu0 0.0
  %871 = vmatpush1.msra.mxu0 0.0
  %872 = vmatprep.subr.mxu0 0.0
  %873 = vmatpush1.msra.mxu0 0.0
  %874 = vmatprep.subr.mxu0 0.0
  %875 = vmatpush1.msra.mxu0 %v125
  %876 = vmatprep.subr.mxu0 0.0
  %877 = vmatpush2.msra.mxu0 0.0
  %878 = vmatprep.subr.mxu0 0.0
  %879 = vmatpush2.msra.mxu0 0.0
  %880 = vmatprep.subr.mxu0 0.0
  %881 = vmatpush2.msra.mxu0 0.0
  %882 = vmatprep.subr.mxu0 0.0
  %883 = vmatpush2.msra.mxu0 0.0
  %884 = vmatprep.subr.mxu0 0.0
  %885 = vmatpush2.msra.mxu0 0.0
  %886 = vmatprep.subr.mxu0 0.0
  %887 = vmatpush2.msra.mxu0 0.0
  %888 = vmatprep.subr.mxu0 0.0
  %889 = vmatpush2.msra.mxu0 0.0
  %890 = vmatprep.subr.mxu0 0.0
  %891 = vmatpush2.msra.mxu0 0.0
  %892 = vmatprep.subr.mxu0 0.0
  %893 = vmatpush2.msra.mxu0 0.0
  %894 = vmatprep.subr.mxu0 0.0
  %895 = vmatpush2.msra.mxu0 0.0
  %896 = vmatprep.subr.mxu0 0.0
  %897 = vmatpush2.msra.mxu0 0.0
  %898 = vmatprep.subr.mxu0 0.0
  %899 = vmatpush2.msra.mxu0 0.0
  %900 = vmatprep.subr.mxu0 0.0
  %901 = vmatpush2.msra.mxu0 0.0
  %902 = vmatprep.subr.mxu0 0.0
  %903 = vmatpush2.msra.mxu0 0.0
  %904 = vmatprep.subr.mxu0 0.0
  %905 = vmatpush2.msra.mxu0 0.0
  %906 = vmatprep.subr.mxu0 0.0
  %907 = vmatpush2.msra.mxu0 0.0
  %908 = vmatprep.mubr.f32.mxu0 0.0
  %909 = vmatmul.mubr.f32.gmra.mxu0 %v842
  %v910 = vpop.f32.mrf.mxu0
  %v911 = vadd.f32 0.0, %v910
  %v912 = vpop.f32.mrf.mxu0
  %913 = vdwg.mxu0
  %v915 = vrot.slane %v911, 2
  %v917 = vadd.f32 %v114, %v915
  %v918 = vmul.f32 %v917, %v120
  %v919 = vtanh.pop %v918
  %v920 = vmul.f32 %v919, 0.5
  %v921 = vadd.f32 %v920, 0.5
  %v923 = vrot.slane %v831, 6
  %v925 = vmul.f32 %v921, %v923
  %927 = vrot.lane.b32.xlu0 %v919, 120
  %v928 = vpop.permute.xlu0 %927
  %v930 = vmul.f32 %v921, %v928
  %932 = vrot.lane.b32.xlu0 %v930, 4
  %v933 = vpop.permute.xlu0 %932
  %v935 = vadd.f32 %v925, %v933
  %v936 = vtanh.pop %v935
  %938 = vrot.lane.b32.xlu0 %v936, 8
  %v939 = vpop.permute.xlu0 %938
  %v941 = vmul.f32 %v921, %v939
  %v943 = vunpack.c.l.s4 1966171168
  %v944 = vunpack.c.0.s8 %v943
  %v945 = vlaneseq
  %v946 = vshrl.u32 %v945, 7
  %v947 = vsub.s32 %v944, %v946
  %v948 = vrot.slane %v218, %v947
  %v949 = vcombine.high %v948, %v948
  %v951 = vunpack.c.l.s4 1966171168
  %v952 = vunpack.c.0.s8 %v951
  %v953 = vlaneseq
  %v954 = vshrl.u32 %v953, 7
  %v955 = vsub.s32 %v952, %v954
  %v956 = vrot.slane %v948, %v955
  %v958 = vunpack.c.l.s4 1966171168
  %v959 = vunpack.c.0.s8 %v958
  %v960 = vlaneseq
  %v961 = vshrl.u32 %v960, 7
  %v962 = vsub.s32 %v959, %v961
  %v963 = vrot.slane %v949, %v962
  %v967 = vunpack.c.l.s4 1966171168
  %v968 = vunpack.c.0.s8 %v967
  %v969 = vlaneseq
  %v970 = vshrl.u32 %v969, 7
  %v971 = vsub.s32 %v968, %v970
  %v972 = vrot.slane %v321, %v971
  %v973 = vcombine.high %v972, %v972
  %v975 = vunpack.c.l.s4 1966171168
  %v976 = vunpack.c.0.s8 %v975
  %v977 = vlaneseq
  %v978 = vshrl.u32 %v977, 7
  %v979 = vsub.s32 %v976, %v978
  %v980 = vrot.slane %v972, %v979
  %v982 = vunpack.c.l.s4 1966171168
  %v983 = vunpack.c.0.s8 %v982
  %v984 = vlaneseq
  %v985 = vshrl.u32 %v984, 7
  %v986 = vsub.s32 %v983, %v985
  %v987 = vrot.slane %v973, %v986
  %v988 = vcombine.high %v980, %v980
  %v989 = vcombine.high %v987, %v987
  %v990 = vcombine.high %v425, %v425
  %v992 = vunpack.c.l.s4 1966171168
  %v993 = vunpack.c.0.s8 %v992
  %v994 = vlaneseq
  %v995 = vshrl.u32 %v994, 7
  %v996 = vsub.s32 %v993, %v995
  %v997 = vrot.slane %v990, %v996
  %v998 = vcombine.high %v997, %v997
  %v1000 = vunpack.c.l.s4 1966171168
  %v1001 = vunpack.c.0.s8 %v1000
  %v1002 = vlaneseq
  %v1003 = vshrl.u32 %v1002, 7
  %v1004 = vsub.s32 %v1001, %v1003
  %v1005 = vrot.slane %v997, %v1004
  %v1007 = vunpack.c.l.s4 1966171168
  %v1008 = vunpack.c.0.s8 %v1007
  %v1009 = vlaneseq
  %v1010 = vshrl.u32 %v1009, 7
  %v1011 = vsub.s32 %v1008, %v1010
  %v1012 = vrot.slane %v998, %v1011
  %v1013 = vcombine.high %v529, %v529
  %v1015 = vunpack.c.l.s4 1966171168
  %v1016 = vunpack.c.0.s8 %v1015
  %v1017 = vlaneseq
  %v1018 = vshrl.u32 %v1017, 7
  %v1019 = vsub.s32 %v1016, %v1018
  %v1020 = vrot.slane %v1013, %v1019
  %v1021 = vcombine.high %v1020, %v1020
  %v1023 = vunpack.c.l.s4 1966171168
  %v1024 = vunpack.c.0.s8 %v1023
  %v1025 = vlaneseq
  %v1026 = vshrl.u32 %v1025, 7
  %v1027 = vsub.s32 %v1024, %v1026
  %v1028 = vrot.slane %v1020, %v1027
  %v1030 = vunpack.c.l.s4 1966171168
  %v1031 = vunpack.c.0.s8 %v1030
  %v1032 = vlaneseq
  %v1033 = vshrl.u32 %v1032, 7
  %v1034 = vsub.s32 %v1031, %v1033
  %v1035 = vrot.slane %v1021, %v1034
  %v1036 = vcombine.high %v1028, %v1028
  %v1037 = vcombine.high %v1035, %v1035
  %v1039 = vunpack.c.l.s4 1966171168
  %v1040 = vunpack.c.0.s8 %v1039
  %v1041 = vlaneseq
  %v1042 = vshrl.u32 %v1041, 7
  %v1043 = vsub.s32 %v1040, %v1042
  %v1044 = vrot.slane %v630, %v1043
  %v1045 = vcombine.high %v1044, %v1044
  %v1047 = vunpack.c.l.s4 1966171168
  %v1048 = vunpack.c.0.s8 %v1047
  %v1049 = vlaneseq
  %v1050 = vshrl.u32 %v1049, 7
  %v1051 = vsub.s32 %v1048, %v1050
  %v1052 = vrot.slane %v1044, %v1051
  %v1054 = vunpack.c.l.s4 1966171168
  %v1055 = vunpack.c.0.s8 %v1054
  %v1056 = vlaneseq
  %v1057 = vshrl.u32 %v1056, 7
  %v1058 = vsub.s32 %v1055, %v1057
  %v1059 = vrot.slane %v1045, %v1058
  %v1061 = vunpack.c.l.s4 1966171168
  %v1062 = vunpack.c.0.s8 %v1061
  %v1063 = vlaneseq
  %v1064 = vshrl.u32 %v1063, 7
  %v1065 = vsub.s32 %v1062, %v1064
  %v1066 = vrot.slane %v733, %v1065
  %v1067 = vcombine.high %v1066, %v1066
  %v1069 = vunpack.c.l.s4 1966171168
  %v1070 = vunpack.c.0.s8 %v1069
  %v1071 = vlaneseq
  %v1072 = vshrl.u32 %v1071, 7
  %v1073 = vsub.s32 %v1070, %v1072
  %v1074 = vrot.slane %v1066, %v1073
  %v1076 = vunpack.c.l.s4 1966171168
  %v1077 = vunpack.c.0.s8 %v1076
  %v1078 = vlaneseq
  %v1079 = vshrl.u32 %v1078, 7
  %v1080 = vsub.s32 %v1077, %v1079
  %v1081 = vrot.slane %v1067, %v1080
  %v1082 = vcombine.high %v1074, %v1074
  %v1083 = vcombine.high %v1081, %v1081
  %v1084 = vcombine.high %v837, %v837
  %v1086 = vunpack.c.l.s4 1966171168
  %v1087 = vunpack.c.0.s8 %v1086
  %v1088 = vlaneseq
  %v1089 = vshrl.u32 %v1088, 7
  %v1090 = vsub.s32 %v1087, %v1089
  %v1091 = vrot.slane %v1084, %v1090
  %v1092 = vcombine.high %v1091, %v1091
  %v1094 = vunpack.c.l.s4 1966171168
  %v1095 = vunpack.c.0.s8 %v1094
  %v1096 = vlaneseq
  %v1097 = vshrl.u32 %v1096, 7
  %v1098 = vsub.s32 %v1095, %v1097
  %v1099 = vrot.slane %v1091, %v1098
  %v1101 = vunpack.c.l.s4 1966171168
  %v1102 = vunpack.c.0.s8 %v1101
  %v1103 = vlaneseq
  %v1104 = vshrl.u32 %v1103, 7
  %v1105 = vsub.s32 %v1102, %v1104
  %v1106 = vrot.slane %v1092, %v1105
  %v1108 = vcombine.high %v941, %v941
  %v1110 = vunpack.c.l.s4 1966171168
  %v1111 = vunpack.c.0.s8 %v1110
  %v1112 = vlaneseq
  %v1113 = vshrl.u32 %v1112, 7
  %v1114 = vsub.s32 %v1111, %v1113
  %v1115 = vrot.slane %v1108, %v1114
  %v1116 = vcombine.high %v1115, %v1115
  %v1118 = vunpack.c.l.s4 1966171168
  %v1119 = vunpack.c.0.s8 %v1118
  %v1120 = vlaneseq
  %v1121 = vshrl.u32 %v1120, 7
  %v1122 = vsub.s32 %v1119, %v1121
  %v1123 = vrot.slane %v1115, %v1122
  %v1125 = vunpack.c.l.s4 1966171168
  %v1126 = vunpack.c.0.s8 %v1125
  %v1127 = vlaneseq
  %v1128 = vshrl.u32 %v1127, 7
  %v1129 = vsub.s32 %v1126, %v1128
  %v1130 = vrot.slane %v1116, %v1129
  %v1131 = vcombine.high %v1123, %v1123
  %v1132 = vcombine.high %v1130, %v1130
  %v1133 = vlaneseq
  %v1134 = vshrl.u32 %v1133, 7
  %v1135 = vsub.s32 0, %v1134
  %v1136 = vrot.slane %v988, %v1135
  %v1137 = vlaneseq
  %v1138 = vshrl.u32 %v1137, 7
  %v1139 = vsub.s32 0, %v1138
  %v1140 = vrot.slane %v989, %v1139
  %v1143 = vlaneseq
  %v1144 = vshrl.u32 %v1143, 7
  %v1145 = vsub.s32 0, %v1144
  %v1146 = vrot.slane %v1005, %v1145
  %v1147 = vlaneseq
  %v1148 = vshrl.u32 %v1147, 7
  %v1149 = vsub.s32 0, %v1148
  %v1150 = vrot.slane %v1012, %v1149
  %v1153 = vlaneseq
  %v1154 = vshrl.u32 %v1153, 7
  %v1155 = vsub.s32 0, %v1154
  %v1156 = vrot.slane %v1036, %v1155
  %v1157 = vlaneseq
  %v1158 = vshrl.u32 %v1157, 7
  %v1159 = vsub.s32 0, %v1158
  %v1160 = vrot.slane %v1037, %v1159
  %v1163 = vlaneseq
  %v1164 = vshrl.u32 %v1163, 7
  %v1165 = vsub.s32 0, %v1164
  %v1166 = vrot.slane %v1052, %v1165
  %v1167 = vlaneseq
  %v1168 = vshrl.u32 %v1167, 7
  %v1169 = vsub.s32 0, %v1168
  %v1170 = vrot.slane %v1059, %v1169
  %v1173 = vlaneseq
  %v1174 = vshrl.u32 %v1173, 7
  %v1175 = vsub.s32 0, %v1174
  %v1176 = vrot.slane %v1082, %v1175
  %v1177 = vlaneseq
  %v1178 = vshrl.u32 %v1177, 7
  %v1179 = vsub.s32 0, %v1178
  %v1180 = vrot.slane %v1083, %v1179
  %v1183 = vlaneseq
  %v1184 = vshrl.u32 %v1183, 7
  %v1185 = vsub.s32 0, %v1184
  %v1186 = vrot.slane %v1099, %v1185
  %v1187 = vlaneseq
  %v1188 = vshrl.u32 %v1187, 7
  %v1189 = vsub.s32 0, %v1188
  %v1190 = vrot.slane %v1106, %v1189
  %v1193 = vlaneseq
  %v1194 = vshrl.u32 %v1193, 7
  %v1195 = vsub.s32 0, %v1194
  %v1196 = vrot.slane %v1131, %v1195
  %v1197 = vlaneseq
  %v1198 = vshrl.u32 %v1197, 7
  %v1199 = vsub.s32 0, %v1198
  %v1200 = vrot.slane %v1132, %v1199
  %vm1203 = vcmask 1040384
  %v1204 = vsel %vm1203, %v956, %v1136
  %v1205 = vsel %vm1203, %v963, %v1140
  %vm1206 = vcmask 1041408
  %v1207 = vsel %vm1206, %v1204, %v1146
  %v1208 = vsel %vm1206, %v1205, %v1150
  %vm1209 = vcmask 1042432
  %v1210 = vsel %vm1209, %v1207, %v1156
  %v1211 = vsel %vm1209, %v1208, %v1160
  %v1212 = vsel %vm38, %v1210, %v1166
  %v1213 = vsel %vm38, %v1211, %v1170
  %vm1214 = vcmask 1044480
  %v1215 = vsel %vm1214, %v1212, %v1176
  %v1216 = vsel %vm1214, %v1213, %v1180
  %vm1217 = vcmask 1045504
  %v1218 = vsel %vm1217, %v1215, %v1186
  %v1219 = vsel %vm1217, %v1216, %v1190
  %vm1220 = vcmask 1046528
  %v1221 = vsel %vm1220, %v1218, %v1196
  %v1222 = vsel %vm1220, %v1219, %v1200
  %v1223 = vlaneseq
  %v1224 = vshrl.u32 %v1223, 7
  %v1225 = vsub.s32 0, %v1224
  %v1226 = vrot.slane %v14, %v1225
  %1229 = vrot.lane.b32.xlu0 %v1221, 116
  %v1230 = vpop.permute.xlu0 %1229
  %1231 = vrot.lane.b32.xlu0 %v1222, 116
  %v1232 = vpop.permute.xlu0 %1231
  %v1233 = vsel %vm31, %v1230, 0
  %v1235 = vsel %vm31, %v1232, 0
  %v1238 = vsel %vm38, %v13, 0
  %1240 = vmatprep.subr.mxu0 0.0
  %1241 = vmatpush1.msra.mxu0 0.0
  %1242 = vmatprep.subr.mxu0 0.0
  %1243 = vmatpush1.msra.mxu0 0.0
  %1244 = vmatprep.subr.mxu0 0.0
  %1245 = vmatpush1.msra.mxu0 0.0
  %1246 = vmatprep.subr.mxu0 0.0
  %1247 = vmatpush1.msra.mxu0 0.0
  %1248 = vmatprep.subr.mxu0 0.0
  %1249 = vmatpush1.msra.mxu0 0.0
  %1250 = vmatprep.subr.mxu0 0.0
  %1251 = vmatpush1.msra.mxu0 0.0
  %1252 = vmatprep.subr.mxu0 0.0
  %1253 = vmatpush1.msra.mxu0 0.0
  %1254 = vmatprep.subr.mxu0 0.0
  %1255 = vmatpush1.msra.mxu0 0.0
  %1256 = vmatprep.subr.mxu0 0.0
  %1257 = vmatpush1.msra.mxu0 0.0
  %1258 = vmatprep.subr.mxu0 0.0
  %1259 = vmatpush1.msra.mxu0 0.0
  %1260 = vmatprep.subr.mxu0 0.0
  %1261 = vmatpush1.msra.mxu0 0.0
  %1262 = vmatprep.subr.mxu0 0.0
  %1263 = vmatpush1.msra.mxu0 0.0
  %1264 = vmatprep.subr.mxu0 0.0
  %1265 = vmatpush1.msra.mxu0 0.0
  %1266 = vmatprep.subr.mxu0 0.0
  %1267 = vmatpush1.msra.mxu0 0.0
  %1268 = vmatprep.subr.mxu0 0.0
  %1269 = vmatpush1.msra.mxu0 0.0
  %1270 = vmatprep.subr.mxu0 0.0
  %1271 = vmatpush1.msra.mxu0 %v1238
  %1272 = vmatprep.subr.mxu0 0.0
  %1273 = vmatpush2.msra.mxu0 0.0
  %1274 = vmatprep.subr.mxu0 0.0
  %1275 = vmatpush2.msra.mxu0 0.0
  %1276 = vmatprep.subr.mxu0 0.0
  %1277 = vmatpush2.msra.mxu0 0.0
  %1278 = vmatprep.subr.mxu0 0.0
  %1279 = vmatpush2.msra.mxu0 0.0
  %1280 = vmatprep.subr.mxu0 0.0
  %1281 = vmatpush2.msra.mxu0 0.0
  %1282 = vmatprep.subr.mxu0 0.0
  %1283 = vmatpush2.msra.mxu0 0.0
  %1284 = vmatprep.subr.mxu0 0.0
  %1285 = vmatpush2.msra.mxu0 0.0
  %1286 = vmatprep.subr.mxu0 0.0
  %1287 = vmatpush2.msra.mxu0 0.0
  %1288 = vmatprep.subr.mxu0 0.0
  %1289 = vmatpush2.msra.mxu0 0.0
  %1290 = vmatprep.subr.mxu0 0.0
  %1291 = vmatpush2.msra.mxu0 0.0
  %1292 = vmatprep.subr.mxu0 0.0
  %1293 = vmatpush2.msra.mxu0 0.0
  %1294 = vmatprep.subr.mxu0 0.0
  %1295 = vmatpush2.msra.mxu0 0.0
  %1296 = vmatprep.subr.mxu0 0.0
  %1297 = vmatpush2.msra.mxu0 0.0
  %1298 = vmatprep.subr.mxu0 0.0
  %1299 = vmatpush2.msra.mxu0 0.0
  %1300 = vmatprep.subr.mxu0 0.0
  %1301 = vmatpush2.msra.mxu0 0.0
  %1302 = vmatprep.subr.mxu0 0.0
  %1303 = vmatpush2.msra.mxu0 0.0
  %1304 = vmatprep.mubr.f32.mxu0 0.0
  %1305 = vmatmul.mubr.f32.gmra.mxu0 %v1233
  %v1306 = vpop.f32.mrf.mxu0
  %v1307 = vadd.f32 %v1226, %v1306
  %v1308 = vpop.f32.mrf.mxu0
  %1309 = vmatprep.mubr.f32.mxu0 0.0
  %1310 = vmatmul.mubr.f32.gmra.mxu0 %v1235
  %v1311 = vpop.f32.mrf.mxu0
  %v1312 = vadd.f32 %v1226, %v1311
  %v1313 = vpop.f32.mrf.mxu0
  %1314 = vdwg.mxu0
  %1315 = vst.msk [vmem:[%s2] sm:$0xff] %vm31, %v1307
  %1316 = vst.msk [vmem:[%s2 + $0x8] sm:$0xff] %vm31, %v1312
  // Predicated region
  $region10: #{tpu_custom_call.1} parent=0 // pred_check
    _
  $region11: #{tpu_custom_call.1} parent=0 // pred_check_branch
    %1318 = sbr.rel (0) target = $region13
  $region12: #{tpu_custom_call.1} parent=0 // pred_region
    _
  $region13: #{tpu_custom_call.1} parent=0 // pred_fallthru
    _
  // Predicated region
  $region14: #{tpu_custom_call.1} parent=0 // pred_check
    _
  $region15: #{tpu_custom_call.1} parent=0 // pred_check_branch
    %1320 = sbr.rel (0) target = $region17
  $region16: #{tpu_custom_call.1} parent=0 // pred_region
    _
  $region17: #{tpu_custom_call.1} parent=0 // pred_fallthru
    _

</llo_original>
